<compile_context>
chip_gen: v5e
topology: v5e:2x2
jax: 0.10.0
libtpu: 0.0.40
codegen_flags: <defaults>
</compile_context>

<pallas_src>
import functools

import jax
import jax.numpy as jnp
from jax.experimental import pallas as pl
from jax.experimental.pallas import tpu as pltpu

_LANE = 128            # vreg lane width
_SUBLANE = 8           # vreg sublanes (f32)
_OUT_TILE_CAP = 2048   # max output lanes per tile (bounds VMEM for big decoders)
_DEFAULT_BLOCK_M = 256 # fills the 256-wide MXU on v6e/v7x; fine on v5e too


def _round_up(x, m):
    return (x + m - 1) // m * m


def _pick_out_tile(out_p):
    """Largest multiple of 128 dividing out_p that is <= _OUT_TILE_CAP."""
    if out_p <= _OUT_TILE_CAP:
        return out_p
    for tn in range(_OUT_TILE_CAP, 0, -_LANE):
        if out_p % tn == 0:
            return tn
    return _LANE


# --------------------------------------------------------------------------
# Kernel:  out[i, j] = relu(z[i] @ W1T + b1) @ W2T[:, j] + b2[j]
# h is computed once per row block (at j == 0) into VMEM scratch and reused
# for every output tile j (the out_p axis is the inner "arbitrary" axis).
# --------------------------------------------------------------------------
def _decoder_kernel(z_ref, w1_ref, b1_ref, w2_ref, b2_ref, out_ref, h_ref):
    @pl.when(pl.program_id(1) == 0)
    def _():
        h = jnp.dot(z_ref[...], w1_ref[...],
                    preferred_element_type=jnp.float32)
        h_ref[...] = jnp.maximum(h + b1_ref[...], 0.0).astype(h_ref.dtype)

    o = jnp.dot(h_ref[...], w2_ref[...], preferred_element_type=jnp.float32)
    out_ref[...] = (o + b2_ref[...]).astype(out_ref.dtype)
    # Note: for very large hid_p, chunk this second matmul's K inside the
    # kernel (fori_loop + f32 accumulator) to avoid spilling the full h tile.


# --------------------------------------------------------------------------
# One-time parameter preparation (NOT in the per-call hot path).
# --------------------------------------------------------------------------
def prepare_decoder_params(w1, b1, w2, b2):
    """w1: (hidden, latent), b1: (hidden,), w2: (N*C, hidden), b2: (N*C,)
    (PyTorch nn.Linear convention).  Pre-transpose to feature-last layout,
    zero-pad feature dims to lane multiples, and cast weights to bf16."""
    hidden, latent = w1.shape
    out_dim = w2.shape[0]
    hid_p = _round_up(hidden, _LANE)
    out_p = _round_up(out_dim, _LANE)

    w1t = jnp.zeros((latent, hid_p), jnp.float32).at[:, :hidden].set(w1.T)
    b1p = jnp.zeros((1, hid_p), jnp.float32).at[0, :hidden].set(b1)
    w2t = jnp.zeros((hid_p, out_p), jnp.float32).at[:hidden, :out_dim].set(w2.T)
    b2p = jnp.zeros((1, out_p), jnp.float32).at[0, :out_dim].set(b2)
    # bf16 weights: native MXU dtype, half the HBM->VMEM DMA.  (int8 on
    # v5e/v6e or fp8 on v7x would quarter it; kept bf16 for drop-in accuracy.)
    return {"w1t": w1t.astype(jnp.bfloat16), "b1": b1p,
            "w2t": w2t.astype(jnp.bfloat16), "b2": b2p}


# --------------------------------------------------------------------------
# Pallas call: grid = (batch-row blocks, out_p tiles).
# --------------------------------------------------------------------------
def _decoder_pallas(zb, params, *, block_m):
    m, latent = zb.shape                    # m is a multiple of block_m
    hid_p = params["w1t"].shape[1]
    out_p = params["w2t"].shape[1]
    tn = _pick_out_tile(out_p)
    grid_m = m // block_m
    grid_n = out_p // tn
    grid = (grid_m, grid_n)

    # Grid-invariant operands: single-buffer them (halves their VMEM use).
    resident = pl.Buffered(1)

    def _spec(shape, index_map, mode=None):
        if mode is None:
            return pl.BlockSpec(shape, index_map)
        return pl.BlockSpec(shape, index_map, pipeline_mode=mode)

    # W2T / b2 tiles only stay resident when there is a single out_p tile.
    w2_mode = resident if grid_n == 1 else None

    in_specs = [
        _spec((block_m, latent), lambda i, j: (i, 0)),                 # z streams
        _spec((latent, hid_p), lambda i, j: (0, 0), resident),         # W1T resident
        _spec((1, hid_p), lambda i, j: (0, 0), resident),              # b1  resident
        _spec((hid_p, tn), lambda i, j: (0, j), w2_mode),              # W2T tile
        _spec((1, tn), lambda i, j: (0, j), w2_mode),                  # b2  tile
    ]
    out_spec = pl.BlockSpec((block_m, tn), lambda i, j: (i, j))

    # VMEM budget from the actual buffers (+2x headroom), capped at 64 MiB so
    # the same limit is valid per-TC on v7x (each TC holds its own weights
    # under megacore sharding).
    w2_bufs = 1 if grid_n == 1 else 2
    need = (latent * hid_p * 2 + hid_p * 4                 # W1T + b1 (1 buffer)
            + (hid_p * tn * 2 + tn * 4) * w2_bufs          # W2T + b2 tiles
            + 2 * block_m * latent * 2                     # z blocks (bf16, 2 bufs)
            + 2 * block_m * tn * 4                         # out blocks (f32, 2 bufs)
            + block_m * hid_p * 2)                         # h scratch (bf16)
    vmem_limit = int(min(max(2 * need + (2 << 20), 16 << 20), 64 << 20))

    flops = 2 * m * (latent * hid_p + hid_p * out_p)
    w2_reads = grid_m if grid_n > 1 else 1                 # re-read per row block when N-tiled
    bytes_accessed = (2 * m * latent + 2 * latent * hid_p + 4 * hid_p
                      + (2 * hid_p * out_p + 4 * out_p) * w2_reads
                      + 4 * m * out_p)

    return pl.pallas_call(
        _decoder_kernel,
        out_shape=jax.ShapeDtypeStruct((m, out_p), jnp.float32),
        grid=grid,
        in_specs=in_specs,
        out_specs=out_spec,
        scratch_shapes=[pltpu.VMEM((block_m, hid_p), jnp.bfloat16)],
        compiler_params=pltpu.CompilerParams(
            dimension_semantics=("parallel", "arbitrary"),
            vmem_limit_bytes=vmem_limit),
        cost_estimate=pl.CostEstimate(
            flops=flops, transcendentals=0, bytes_accessed=bytes_accessed),
    )(zb, params["w1t"], params["b1"], params["w2t"], params["b2"])


# --------------------------------------------------------------------------
# Public forward passes.
# --------------------------------------------------------------------------
@functools.partial(jax.jit, static_argnames=("num_nodes", "out_channels"))
def graph_decoder_forward(z, params, *, num_nodes, out_channels):
    """Single-latent forward matching GraphDecoder.forward(z):
    returns (num_nodes, out_channels).  Intrinsically weight-bandwidth-bound;
    prefer graph_decoder_forward_batched for repeated decodes."""
    latent = params["w1t"].shape[0]
    out_dim = num_nodes * out_channels
    z2 = jnp.reshape(z, (1, latent)).astype(jnp.bfloat16)
    zb = jnp.pad(z2, ((0, _SUBLANE - 1), (0, 0)))   # sublane-aligned row block
    out = _decoder_pallas(zb, params, block_m=_SUBLANE)
    row = out[0]
    if out_dim != out.shape[1]:                     # skip slice when lane-aligned
        row = row[:out_dim]
    return row.reshape(num_nodes, out_channels)


@functools.partial(jax.jit,
                   static_argnames=("num_nodes", "out_channels", "block_m"))
def graph_decoder_forward_batched(zb, params, *, num_nodes, out_channels,
                                  block_m=_DEFAULT_BLOCK_M):
    """Throughput path: (B, latent) -> (B, num_nodes, out_channels).
    Amortizes launch + weight DMA over B rows; weights stay VMEM-resident."""
    b, latent = zb.shape
    out_dim = num_nodes * out_channels
    bm = min(block_m, _round_up(b, _SUBLANE))
    m = _round_up(b, bm)
    zb_p = jnp.pad(zb.astype(jnp.bfloat16), ((0, m - b), (0, 0)))
    out = _decoder_pallas(zb_p, params, block_m=bm)
    if m != b:
        out = out[:b]
    if out_dim != out.shape[1]:                     # skip slice when lane-aligned
        out = out[:, :out_dim]
    return out.reshape(b, num_nodes, out_channels)


def _torch_linear_init(key, out_features, in_features):
    """Deterministic init mimicking nn.Linear defaults (+/- 1/sqrt(fan_in))."""
    kw, kb = jax.random.split(key)
    bound = 1.0 / jnp.sqrt(jnp.float32(in_features))
    w = jax.random.uniform(kw, (out_features, in_features), jnp.float32,
                           -bound, bound)
    b = jax.random.uniform(kb, (out_features,), jnp.float32, -bound, bound)
    return w, b


if __name__ == "__main__":
    latent_dim = 16
    hidden_dim = 32
    out_channels = 4
    num_nodes = 8

    key = jax.random.PRNGKey(0)
    k_z, k_fc1, k_fc2, k_zb = jax.random.split(key, 4)

    z = jax.random.normal(k_z, (latent_dim,), jnp.float32)
    w1, b1 = _torch_linear_init(k_fc1, hidden_dim, latent_dim)
    w2, b2 = _torch_linear_init(k_fc2, num_nodes * out_channels, hidden_dim)

    # One-time setup: transpose + lane padding + bf16 cast (outside hot path).
    params = prepare_decoder_params(w1, b1, w2, b2)

    # --- single-latent forward (original module semantics) ---
    out = graph_decoder_forward(z, params, num_nodes=num_nodes,
                                out_channels=out_channels)
    out = jax.block_until_ready(out)

    h_ref = jnp.maximum(z @ w1.T + b1, 0.0)
    ref = (h_ref @ w2.T + b2).reshape(num_nodes, out_channels)
    assert out.shape == (num_nodes, out_channels)
    # bf16 weights/activations into the MXU -> relaxed tolerance vs f32 ref.
    assert jnp.allclose(out, ref, atol=3e-2, rtol=3e-2), (
        float(jnp.max(jnp.abs(out - ref))))

    # --- batched forward (throughput path exercising the grid) ---
    B = 4
    zb = jax.random.normal(k_zb, (B, latent_dim), jnp.float32)
    outb = graph_decoder_forward_batched(zb, params, num_nodes=num_nodes,
                                         out_channels=out_channels)
    outb = jax.block_until_ready(outb)

    hb_ref = jnp.maximum(zb @ w1.T + b1, 0.0)
    refb = (hb_ref @ w2.T + b2).reshape(B, num_nodes, out_channels)
    assert outb.shape == (B, num_nodes, out_channels)
    assert jnp.allclose(outb, refb, atol=3e-2, rtol=3e-2), (
        float(jnp.max(jnp.abs(outb - refb))))

    print("KERNEL_OK")
</pallas_src>

<mosaic_0001>
module attributes {stable_mosaic.version = 11 : i64} {
  func.func @_decoder_kernel(%arg0: i32, %arg1: i32, %arg2: memref<8x16xbf16, #tpu.memory_space<vmem>>, %arg3: memref<16x128xbf16, #tpu.memory_space<vmem>>, %arg4: memref<1x128xf32, #tpu.memory_space<vmem>>, %arg5: memref<128x128xbf16, #tpu.memory_space<vmem>>, %arg6: memref<1x128xf32, #tpu.memory_space<vmem>>, %arg7: memref<8x128xf32, #tpu.memory_space<vmem>>, %arg8: memref<8x128xbf16, #tpu.memory_space<vmem>>) attributes {dimension_semantics = [#tpu.dimension_semantics<parallel>, #tpu.dimension_semantics<arbitrary>], iteration_bounds = array<i64: 1, 1>, scalar_prefetch = 0 : i64, scratch_operands = 1 : i64, tpu.core_type = #tpu.core_type<tc>, window_params = [{transform_indices = @transform_0, window_bounds = array<i64: 8, 16>}, {pipeline_mode = #tpu.pipeline_mode<synchronous>, transform_indices = @transform_1, window_bounds = array<i64: 16, 128>}, {pipeline_mode = #tpu.pipeline_mode<synchronous>, transform_indices = @transform_2, window_bounds = array<i64: 1, 128>}, {pipeline_mode = #tpu.pipeline_mode<synchronous>, transform_indices = @transform_3, window_bounds = array<i64: 128, 128>}, {pipeline_mode = #tpu.pipeline_mode<synchronous>, transform_indices = @transform_4, window_bounds = array<i64: 1, 128>}, {transform_indices = @transform_5, window_bounds = array<i64: 8, 128>}]} {
    %c0_i32 = arith.constant 0 : i32
    %0 = arith.cmpi eq, %arg1, %c0_i32 : i32
    %1 = arith.extui %0 : i1 to i32
    %c0_i32_0 = arith.constant 0 : i32
    %2 = arith.cmpi ne, %1, %c0_i32_0 : i32
    scf.if %2 {
      %c0_8 = arith.constant 0 : index
      %c0_9 = arith.constant 0 : index
      %10 = vector.load %arg2[%c0_8, %c0_9] : memref<8x16xbf16, #tpu.memory_space<vmem>>, vector<8x16xbf16>
      %c0_10 = arith.constant 0 : index
      %c0_11 = arith.constant 0 : index
      %11 = vector.load %arg3[%c0_10, %c0_11] : memref<16x128xbf16, #tpu.memory_space<vmem>>, vector<16x128xbf16>
      %cst_12 = arith.constant dense<0.000000e+00> : vector<8x128xf32>
      %12 = tpu.matmul %10, %11, %cst_12 {dimension_numbers = #tpu.dot_dimension_numbers<[1], [0], [0], [1], [0, 0, 1, 1], [], []>} : vector<8x16xbf16>, vector<16x128xbf16>, vector<8x128xf32> -> vector<8x128xf32>
      %c0_13 = arith.constant 0 : index
      %c0_14 = arith.constant 0 : index
      %13 = vector.load %arg4[%c0_13, %c0_14] : memref<1x128xf32, #tpu.memory_space<vmem>>, vector<1x128xf32>
      %14 = vector.broadcast %13 : vector<1x128xf32> to vector<8x128xf32>
      %15 = arith.addf %12, %14 : vector<8x128xf32>
      %cst_15 = arith.constant 0.000000e+00 : f32
      %16 = vector.broadcast %cst_15 : f32 to vector<8x128xf32>
      %17 = arith.maximumf %15, %16 : vector<8x128xf32>
      %18 = arith.truncf %17 : vector<8x128xf32> to vector<8x128xbf16>
      %c0_16 = arith.constant 0 : index
      %c0_17 = arith.constant 0 : index
      %19 = vector.load %arg8[%c0_16, %c0_17] : memref<8x128xbf16, #tpu.memory_space<vmem>>, vector<8x128xbf16>
      tpu.vector_store %arg8[%c0_16, %c0_17], %18 {strides = array<i32>} : memref<8x128xbf16, #tpu.memory_space<vmem>>, vector<8x128xbf16>,
    } else {
    }
    %c0 = arith.constant 0 : index
    %c0_1 = arith.constant 0 : index
    %3 = vector.load %arg8[%c0, %c0_1] : memref<8x128xbf16, #tpu.memory_space<vmem>>, vector<8x128xbf16>
    %c0_2 = arith.constant 0 : index
    %c0_3 = arith.constant 0 : index
    %4 = vector.load %arg5[%c0_2, %c0_3] : memref<128x128xbf16, #tpu.memory_space<vmem>>, vector<128x128xbf16>
    %cst = arith.constant dense<0.000000e+00> : vector<8x128xf32>
    %5 = tpu.matmul %3, %4, %cst {dimension_numbers = #tpu.dot_dimension_numbers<[1], [0], [0], [1], [0, 0, 1, 1], [], []>} : vector<8x128xbf16>, vector<128x128xbf16>, vector<8x128xf32> -> vector<8x128xf32>
    %c0_4 = arith.constant 0 : index
    %c0_5 = arith.constant 0 : index
    %6 = vector.load %arg6[%c0_4, %c0_5] : memref<1x128xf32, #tpu.memory_space<vmem>>, vector<1x128xf32>
    %7 = vector.broadcast %6 : vector<1x128xf32> to vector<8x128xf32>
    %8 = arith.addf %5, %7 : vector<8x128xf32>
    %c0_6 = arith.constant 0 : index
    %c0_7 = arith.constant 0 : index
    %9 = vector.load %arg7[%c0_6, %c0_7] : memref<8x128xf32, #tpu.memory_space<vmem>>, vector<8x128xf32>
    tpu.vector_store %arg7[%c0_6, %c0_7], %8 {strides = array<i32>} : memref<8x128xf32, #tpu.memory_space<vmem>>, vector<8x128xf32>,
    return
  }
  func.func @transform_0(%arg0: i32, %arg1: i32) -> (i32, i32) {
    %c0_i32 = arith.constant 0 : i32
    %c0_i32_0 = arith.constant 0 : i32
    return %arg0, %c0_i32 : i32, i32
  }
  func.func @transform_1(%arg0: i32, %arg1: i32) -> (i32, i32) {
    %c0_i32 = arith.constant 0 : i32
    %c0_i32_0 = arith.constant 0 : i32
    %c0_i32_1 = arith.constant 0 : i32
    return %c0_i32, %c0_i32_0 : i32, i32
  }
  func.func @transform_2(%arg0: i32, %arg1: i32) -> (i32, i32) {
    %c0_i32 = arith.constant 0 : i32
    %c0_i32_0 = arith.constant 0 : i32
    %c0_i32_1 = arith.constant 0 : i32
    return %c0_i32, %c0_i32_0 : i32, i32
  }
  func.func @transform_3(%arg0: i32, %arg1: i32) -> (i32, i32) {
    %c0_i32 = arith.constant 0 : i32
    %c0_i32_0 = arith.constant 0 : i32
    return %c0_i32, %arg1 : i32, i32
  }
  func.func @transform_4(%arg0: i32, %arg1: i32) -> (i32, i32) {
    %c0_i32 = arith.constant 0 : i32
    %c0_i32_0 = arith.constant 0 : i32
    return %c0_i32, %arg1 : i32, i32
  }
  func.func @transform_5(%arg0: i32, %arg1: i32) -> (i32, i32) {
    %c0_i32 = arith.constant 0 : i32
    return %arg0, %arg1 : i32, i32
  }
}

</mosaic_0001>

<llo_original>
// kernel: graph_decoder_forward.1
$region0: #{graph_decoder_forward.1}
  #allocation0 [shape = 'u32[]', space=smem, size = 0x4, offset = 0x4, fixed_abs, tag = 'smem constant byte address 0x4 - core index']
  #allocation1 [shape = 'u32[72,128]{1,0:T(1,128)}', space=vmem, size = 0x9000, scoped, tag = 'internal scratch']
  #allocation2 [shape = 'bf16[8,128]{1,0:T(8,128)(2,1)}', space=vmem, size = 0x800, scoped, tag = 'scratch operand']
  %s0 = inlined_call_operand.vmem [shape: bf16[8,16], index: 0, kind: input, shape index: {}]
  %s1 = inlined_call_operand.vmem [shape: bf16[16,128], index: 1, kind: input, shape index: {}]
  %s2 = inlined_call_operand.vmem [shape: f32[1,128], index: 2, kind: input, shape index: {}]
  %s3 = inlined_call_operand.hbm [shape: bf16[128,128], index: 3, kind: input, shape index: {}]
  %s4 = inlined_call_operand.vmem [shape: f32[1,128], index: 4, kind: input, shape index: {}]
  %s5 = inlined_call_operand.vmem [shape: f32[8,128], index: 5, kind: output, shape index: {}]
  %s6 = sld [smem:[#allocation0]]
  $region38: #{graph_decoder_forward.1} parent=0
    _
  %s8 = ssub.s32 1, %s6
  %s9 = scalar_select 0, %s8, %s6
  $region1: #{graph_decoder_forward.1} parent=0
    #allocation3 [shape = 'u8[32768]{0}', space=vmem, size = 0x8000, scoped, tag = 'input window, operand 3, single buffered']
    #allocation4 [shape = 's32[1]{0}', space=sflag, size = 0x4, scoped, tag = 'scoped memory for graph_decoder_forward.1']
    %10 = vsyncpa [#allocation4], 0
    // Predicated region
    $region2: #{graph_decoder_forward.1} parent=1 // pred_check
      _
    $region3: #{graph_decoder_forward.1} parent=1 // pred_check_branch
      %12 = sbr.rel (0) target = $region5
    $region4: #{graph_decoder_forward.1} parent=1 // pred_region
      _
    $region5: #{graph_decoder_forward.1} parent=1 // pred_fallthru
      _
    // Predicated region
    $region6: #{graph_decoder_forward.1} parent=1 // pred_check
      _
    $region7: #{graph_decoder_forward.1} parent=1 // pred_check_branch
      %14 = sbr.rel (0) target = $region9
    $region8: #{graph_decoder_forward.1} parent=1 // pred_region
      _
    $region9: #{graph_decoder_forward.1} parent=1 // pred_fallthru
      _
    // Predicated region
    $region10: #{graph_decoder_forward.1} parent=1 // pred_check
      _
    $region11: #{graph_decoder_forward.1} parent=1 // pred_check_branch
      %16 = sbr.rel (0) target = $region13
    $region12: #{graph_decoder_forward.1} parent=1 // pred_region
      _
    $region13: #{graph_decoder_forward.1} parent=1 // pred_fallthru
      _
    // Predicated region
    $region14: #{graph_decoder_forward.1} parent=1 // pred_check
      _
    $region15: #{graph_decoder_forward.1} parent=1 // pred_check_branch
      %18 = sbr.rel (0) target = $region17
    $region16: #{graph_decoder_forward.1} parent=1 // pred_region
      %20 = vsyncadd [#allocation4], 0
      %s21 = sshll.u32 %s3, 4
      %s22 = int_to_ptr.hbm [resolvable:$true] %s21
      %s23 = sshll.u32 [#allocation3], 4
      %s24 = int_to_ptr.vmem [resolvable:$true] %s23
      %29 = dma.hbm_to_vmem [thread:$0]  %s22, 1024, %s24, [#allocation4], 64, 64, 4
    $region17: #{graph_decoder_forward.1} parent=1 // pred_fallthru
      _
    // Predicated region
    $region18: #{graph_decoder_forward.1} parent=1 // pred_check
      _
    $region19: #{graph_decoder_forward.1} parent=1 // pred_check_branch
      %31 = sbr.rel (0) target = $region21
    $region20: #{graph_decoder_forward.1} parent=1 // pred_region
      _
    $region21: #{graph_decoder_forward.1} parent=1 // pred_fallthru
      _
    // Predicated region
    $region22: #{graph_decoder_forward.1} parent=1 // pred_check
      _
    $region23: #{graph_decoder_forward.1} parent=1 // pred_check_branch
      %33 = sbr.rel (0) target = $region25
    $region24: #{graph_decoder_forward.1} parent=1 // pred_region
      %35 = dma.done [#allocation4], 1024
    $region25: #{graph_decoder_forward.1} parent=1 // pred_fallthru
      _
    %p37 = scmp.eq.s32.totalorder 0, 0
    // Predicated region
    $region26: #{graph_decoder_forward.1} parent=1 // pred_check
      %p38 = pneg %p37
    $region27: #{graph_decoder_forward.1} parent=1 // pred_check_branch
      %40 = sbr.rel (%p38) target = $region29
    $region28: #{graph_decoder_forward.1} parent=1 // pred_region
      %v41 = vld [vmem:[%s0] sm:$0xf]
      %v42 = vld [vmem:[%s1] sm:$0xf]
      %v43 = vld [vmem:[%s1 + $0x4] sm:$0xf]
      %v44 = vld [vmem:[%s2] sm:$0x1]
      %v46 = vperm.slane %v44, 0
      %v50 = vunpack.c.l.b16 %v42
      %v51 = vunpack.c.l.b16 %v43
      %v52 = vpack.c.b16 %v51, %v50
      %vm54 = vcmask 130048
      %v56 = vsel %vm54, %v41, 0
      %58 = vmatpush.bf16.msra.mxu0 0
      %59 = vmatpush.bf16.msra.mxu0 0
      %60 = vmatpush.bf16.msra.mxu0 0
      %61 = vmatpush.bf16.msra.mxu0 0
      %62 = vmatpush.bf16.msra.mxu0 0
      %63 = vmatpush.bf16.msra.mxu0 0
      %64 = vmatpush.bf16.msra.mxu0 0
      %65 = vmatpush.bf16.msra.mxu0 %v52
      %66 = vmatmul.bf16.gmra.mxu0 %v56
      %v67 = vpop.f32.mrf.mxu0
      %v68 = vadd.f32 %v46, %v67
      %v69 = vpop.f32.mrf.mxu0
      %70 = vdwg.mxu0
      %v71 = vmax.f32 %v68, 0.0
      %v72 = vpack.c.bf16 %v71, %v71
      %73 = vst [vmem:[#allocation2] sm:$0xf] %v72
    $region29: #{graph_decoder_forward.1} parent=1 // pred_fallthru
      _
    %v74 = vld [vmem:[#allocation2] sm:$0xf]
    %v75 = vld [vmem:[#allocation3] sm:$0xf]
    %v76 = vld [vmem:[#allocation3 + $0x4] sm:$0xf]
    %v77 = vld [vmem:[#allocation3 + $0x8] sm:$0xf]
    %v78 = vld [vmem:[#allocation3 + $0xc] sm:$0xf]
    %v79 = vld [vmem:[#allocation3 + $0x10] sm:$0xf]
    %v80 = vld [vmem:[#allocation3 + $0x14] sm:$0xf]
    %v81 = vld [vmem:[#allocation3 + $0x18] sm:$0xf]
    %v82 = vld [vmem:[#allocation3 + $0x1c] sm:$0xf]
    %v83 = vld [vmem:[#allocation3 + $0x20] sm:$0xf]
    %v84 = vld [vmem:[#allocation3 + $0x24] sm:$0xf]
    %v85 = vld [vmem:[#allocation3 + $0x28] sm:$0xf]
    %v86 = vld [vmem:[#allocation3 + $0x2c] sm:$0xf]
    %v87 = vld [vmem:[#allocation3 + $0x30] sm:$0xf]
    %v88 = vld [vmem:[#allocation3 + $0x34] sm:$0xf]
    %v89 = vld [vmem:[#allocation3 + $0x38] sm:$0xf]
    %v90 = vld [vmem:[#allocation3 + $0x3c] sm:$0xf]
    %v91 = vld [vmem:[%s4] sm:$0x1]
    %v93 = vperm.slane %v91, 0
    %v111 = vunpack.c.l.b16 %v75
    %v112 = vunpack.c.l.b16 %v76
    %v113 = vunpack.c.l.b16 %v77
    %v114 = vunpack.c.l.b16 %v78
    %v115 = vunpack.c.l.b16 %v79
    %v116 = vunpack.c.l.b16 %v80
    %v117 = vunpack.c.l.b16 %v81
    %v118 = vunpack.c.l.b16 %v82
    %v119 = vunpack.c.l.b16 %v83
    %v120 = vunpack.c.l.b16 %v84
    %v121 = vunpack.c.l.b16 %v85
    %v122 = vunpack.c.l.b16 %v86
    %v123 = vunpack.c.l.b16 %v87
    %v124 = vunpack.c.l.b16 %v88
    %v125 = vunpack.c.l.b16 %v89
    %v126 = vunpack.c.l.b16 %v90
    %v127 = vpack.c.b16 %v112, %v111
    %v128 = vpack.c.b16 %v114, %v113
    %v129 = vpack.c.b16 %v116, %v115
    %v130 = vpack.c.b16 %v118, %v117
    %v131 = vpack.c.b16 %v120, %v119
    %v132 = vpack.c.b16 %v122, %v121
    %v133 = vpack.c.b16 %v124, %v123
    %v134 = vpack.c.b16 %v126, %v125
    %143 = vmatpush.bf16.msra.mxu0 %v134
    %144 = vmatpush.bf16.msra.mxu0 %v133
    %145 = vmatpush.bf16.msra.mxu0 %v132
    %146 = vmatpush.bf16.msra.mxu0 %v131
    %147 = vmatpush.bf16.msra.mxu0 %v130
    %148 = vmatpush.bf16.msra.mxu0 %v129
    %149 = vmatpush.bf16.msra.mxu0 %v128
    %150 = vmatpush.bf16.msra.mxu0 %v127
    %151 = vmatmul.bf16.gmra.mxu0 %v74
    %v152 = vpop.f32.mrf.mxu0
    %v153 = vadd.f32 %v93, %v152
    %v154 = vpop.f32.mrf.mxu0
    %155 = vdwg.mxu0
    %156 = vst [vmem:[%s5] sm:$0xff] %v153
    // Predicated region
    $region30: #{graph_decoder_forward.1} parent=1 // pred_check
      _
    $region31: #{graph_decoder_forward.1} parent=1 // pred_check_branch
      %158 = sbr.rel (0) target = $region33
    $region32: #{graph_decoder_forward.1} parent=1 // pred_region
      _
    $region33: #{graph_decoder_forward.1} parent=1 // pred_fallthru
      _
    // Predicated region
    $region34: #{graph_decoder_forward.1} parent=1 // pred_check
      _
    $region35: #{graph_decoder_forward.1} parent=1 // pred_check_branch
      %160 = sbr.rel (0) target = $region37
    $region36: #{graph_decoder_forward.1} parent=1 // pred_region
      _
    $region37: #{graph_decoder_forward.1} parent=1 // pred_fallthru
      _
    %161 = vsyncpa [#allocation4], 1

</llo_original>
